<compile_context>
chip_gen: v6e
topology: v6e:2x2x1
jax: 0.10.0
libtpu: 0.0.40
codegen_flags: <defaults>
</compile_context>

<pallas_src>
import jax
import jax.numpy as jnp
from jax.experimental import pallas as pl
from jax.experimental.pallas import tpu as pltpu


def decoder_kernel(z_ref, w1_ref, b1_ref, w2_ref, b2_ref, out_ref):
    # fc1: bf16 MXU inputs, f32 accumulation; bias add + ReLU in f32
    h = jnp.dot(z_ref[...].astype(jnp.bfloat16), w1_ref[...],
                preferred_element_type=jnp.float32)
    h = jnp.maximum(h + b1_ref[...], 0.0)

    # fc2: bf16 MXU inputs, f32 accumulation; bias add in f32
    logits = jnp.dot(h.astype(jnp.bfloat16), w2_ref[...],
                     preferred_element_type=jnp.float32)
    logits = logits + b2_ref[...]

    # sigmoid(x) == 0.5 * tanh(0.5 * x) + 0.5  (one EUP op, numerically stable)
    out_ref[...] = (0.5 * jnp.tanh(0.5 * logits) + 0.5).astype(out_ref.dtype)


def decoder_forward(z, w1, b1, w2, b2, *, batch_tile=512, out_dtype=jnp.float32):
    """z: [B, latent] f32; w1/w2: [in, out] bf16; b1/b2: [1, out] f32."""
    B, latent_dim = z.shape
    hidden_dim, out_dim = w2.shape

    # Batch tile: force a multiple of 8 sublanes.
    batch_tile = max(8, (batch_tile // 8) * 8)
    if B > 8:
        # Cap at ~half the batch (rounded up to 8) so the grid has >= 2 steps
        # and the "parallel" batch axis can use both v7x TensorCores.
        half = ((pl.cdiv(B, 2) + 7) // 8) * 8
        tb = min(batch_tile, half)
    else:
        tb = min(batch_tile, ((B + 7) // 8) * 8)

    b_pad = pl.cdiv(B, tb) * tb
    if b_pad != B:
        z = jnp.pad(z, ((0, b_pad - B), (0, 0)))

    out = pl.pallas_call(
        decoder_kernel,
        out_shape=jax.ShapeDtypeStruct((b_pad, out_dim), out_dtype),
        grid_spec=pltpu.PrefetchScalarGridSpec(
            num_scalar_prefetch=0,
            grid=(b_pad // tb,),
            in_specs=[
                # z streams per batch tile
                pl.BlockSpec((tb, latent_dim), lambda i: (i, 0)),
                # weights / biases: same block every step -> fetched once,
                # VMEM-resident across the whole grid
                pl.BlockSpec((latent_dim, hidden_dim), lambda i: (0, 0)),
                pl.BlockSpec((1, hidden_dim), lambda i: (0, 0)),
                pl.BlockSpec((hidden_dim, out_dim), lambda i: (0, 0)),
                pl.BlockSpec((1, out_dim), lambda i: (0, 0)),
            ],
            out_specs=pl.BlockSpec((tb, out_dim), lambda i: (i, 0)),
        ),
        compiler_params=pltpu.CompilerParams(
            dimension_semantics=("parallel",),
        ),
    )(z, w1, b1, w2, b2)

    if b_pad != B:
        out = out[:B]
    return out


def init_decoder_params(key, latent_dim, hidden_dim, output_dim):
    """nn.Linear-style init (uniform +-1/sqrt(fan_in)); weights pre-cast to
    bf16 ONCE here (layout [in, out] so the kernel computes z @ W); biases
    kept f32 [1, out].  No per-call padding/casting work remains."""
    k1, k2, k3, k4 = jax.random.split(key, 4)
    bound1 = 1.0 / (latent_dim ** 0.5)
    bound2 = 1.0 / (hidden_dim ** 0.5)
    w1 = jax.random.uniform(k1, (latent_dim, hidden_dim), jnp.float32,
                            minval=-bound1, maxval=bound1).astype(jnp.bfloat16)
    b1 = jax.random.uniform(k2, (1, hidden_dim), jnp.float32,
                            minval=-bound1, maxval=bound1)
    w2 = jax.random.uniform(k3, (hidden_dim, output_dim), jnp.float32,
                            minval=-bound2, maxval=bound2).astype(jnp.bfloat16)
    b2 = jax.random.uniform(k4, (1, output_dim), jnp.float32,
                            minval=-bound2, maxval=bound2)
    return w1, b1, w2, b2


if __name__ == "__main__":
    latent_dim = 20
    hidden_dim = 256
    output_dim = 784    # flattened 28x28 MNIST reconstruction
    batch = 8

    key = jax.random.PRNGKey(0)
    kz, kp = jax.random.split(key)
    z = jax.random.normal(kz, (batch, latent_dim), jnp.float32)
    w1, b1, w2, b2 = init_decoder_params(kp, latent_dim, hidden_dim, output_dim)

    x_recon = decoder_forward(z, w1, b1, w2, b2)
    jax.block_until_ready(x_recon)

    # Reference in plain JAX with matching precision (bf16 MXU inputs, f32 acc).
    w1f = w1.astype(jnp.float32)
    w2f = w2.astype(jnp.float32)
    zf = z.astype(jnp.bfloat16).astype(jnp.float32)
    h_ref = jnp.maximum(zf @ w1f + b1, 0.0)
    hf = h_ref.astype(jnp.bfloat16).astype(jnp.float32)
    x_ref = jax.nn.sigmoid(hf @ w2f + b2)

    assert x_recon.shape == (batch, output_dim)
    assert jnp.allclose(x_recon, x_ref, atol=1e-3, rtol=1e-3)

    print("KERNEL_OK")
</pallas_src>

<mosaic_0001>
module attributes {stable_mosaic.version = 11 : i64} {
  func.func @decoder_kernel(%arg0: i32, %arg1: memref<8x20xf32, #tpu.memory_space<vmem>>, %arg2: memref<20x256xbf16, #tpu.memory_space<vmem>>, %arg3: memref<1x256xf32, #tpu.memory_space<vmem>>, %arg4: memref<256x784xbf16, #tpu.memory_space<vmem>>, %arg5: memref<1x784xf32, #tpu.memory_space<vmem>>, %arg6: memref<8x784xf32, #tpu.memory_space<vmem>>) attributes {dimension_semantics = [#tpu.dimension_semantics<parallel>], iteration_bounds = array<i64: 1>, scalar_prefetch = 0 : i64, scratch_operands = 0 : i64, tpu.core_type = #tpu.core_type<tc>, window_params = [{transform_indices = @transform_0, window_bounds = array<i64: 8, 20>}, {pipeline_mode = #tpu.pipeline_mode<synchronous>, transform_indices = @transform_1, window_bounds = array<i64: 20, 256>}, {pipeline_mode = #tpu.pipeline_mode<synchronous>, transform_indices = @transform_2, window_bounds = array<i64: 1, 256>}, {pipeline_mode = #tpu.pipeline_mode<synchronous>, transform_indices = @transform_3, window_bounds = array<i64: 256, 784>}, {pipeline_mode = #tpu.pipeline_mode<synchronous>, transform_indices = @transform_4, window_bounds = array<i64: 1, 784>}, {transform_indices = @transform_5, window_bounds = array<i64: 8, 784>}]} {
    %c0 = arith.constant 0 : index
    %c0_0 = arith.constant 0 : index
    %0 = vector.load %arg1[%c0, %c0_0] : memref<8x20xf32, #tpu.memory_space<vmem>>, vector<8x20xf32>
    %1 = arith.truncf %0 : vector<8x20xf32> to vector<8x20xbf16>
    %c0_1 = arith.constant 0 : index
    %c0_2 = arith.constant 0 : index
    %2 = vector.load %arg2[%c0_1, %c0_2] : memref<20x256xbf16, #tpu.memory_space<vmem>>, vector<20x256xbf16>
    %cst = arith.constant dense<0.000000e+00> : vector<8x256xf32>
    %3 = tpu.matmul %1, %2, %cst {dimension_numbers = #tpu.dot_dimension_numbers<[1], [0], [0], [1], [0, 0, 1, 1], [], []>} : vector<8x20xbf16>, vector<20x256xbf16>, vector<8x256xf32> -> vector<8x256xf32>
    %c0_3 = arith.constant 0 : index
    %c0_4 = arith.constant 0 : index
    %4 = vector.load %arg3[%c0_3, %c0_4] : memref<1x256xf32, #tpu.memory_space<vmem>>, vector<1x256xf32>
    %5 = vector.broadcast %4 : vector<1x256xf32> to vector<8x256xf32>
    %6 = arith.addf %3, %5 : vector<8x256xf32>
    %cst_5 = arith.constant 0.000000e+00 : f32
    %7 = vector.broadcast %cst_5 : f32 to vector<8x256xf32>
    %8 = arith.maximumf %6, %7 : vector<8x256xf32>
    %9 = arith.truncf %8 : vector<8x256xf32> to vector<8x256xbf16>
    %c0_6 = arith.constant 0 : index
    %c0_7 = arith.constant 0 : index
    %10 = vector.load %arg4[%c0_6, %c0_7] : memref<256x784xbf16, #tpu.memory_space<vmem>>, vector<256x784xbf16>
    %cst_8 = arith.constant dense<0.000000e+00> : vector<8x784xf32>
    %11 = tpu.matmul %9, %10, %cst_8 {dimension_numbers = #tpu.dot_dimension_numbers<[1], [0], [0], [1], [0, 0, 1, 1], [], []>} : vector<8x256xbf16>, vector<256x784xbf16>, vector<8x784xf32> -> vector<8x784xf32>
    %c0_9 = arith.constant 0 : index
    %c0_10 = arith.constant 0 : index
    %12 = vector.load %arg5[%c0_9, %c0_10] : memref<1x784xf32, #tpu.memory_space<vmem>>, vector<1x784xf32>
    %13 = vector.broadcast %12 : vector<1x784xf32> to vector<8x784xf32>
    %14 = arith.addf %11, %13 : vector<8x784xf32>
    %cst_11 = arith.constant 5.000000e-01 : f32
    %15 = vector.broadcast %cst_11 : f32 to vector<8x784xf32>
    %16 = arith.mulf %15, %14 : vector<8x784xf32>
    %17 = math.tanh %16 : vector<8x784xf32>
    %cst_12 = arith.constant 5.000000e-01 : f32
    %18 = vector.broadcast %cst_12 : f32 to vector<8x784xf32>
    %19 = arith.mulf %18, %17 : vector<8x784xf32>
    %cst_13 = arith.constant 5.000000e-01 : f32
    %20 = vector.broadcast %cst_13 : f32 to vector<8x784xf32>
    %21 = arith.addf %19, %20 : vector<8x784xf32>
    %c0_14 = arith.constant 0 : index
    %c0_15 = arith.constant 0 : index
    %22 = vector.load %arg6[%c0_14, %c0_15] : memref<8x784xf32, #tpu.memory_space<vmem>>, vector<8x784xf32>
    tpu.vector_store %arg6[%c0_14, %c0_15], %21 {strides = array<i32>} : memref<8x784xf32, #tpu.memory_space<vmem>>, vector<8x784xf32>,
    return
  }
  func.func @transform_0(%arg0: i32) -> (i32, i32) {
    %c0_i32 = arith.constant 0 : i32
    %c0_i32_0 = arith.constant 0 : i32
    return %arg0, %c0_i32 : i32, i32
  }
  func.func @transform_1(%arg0: i32) -> (i32, i32) {
    %c0_i32 = arith.constant 0 : i32
    %c0_i32_0 = arith.constant 0 : i32
    %c0_i32_1 = arith.constant 0 : i32
    return %c0_i32, %c0_i32_0 : i32, i32
  }
  func.func @transform_2(%arg0: i32) -> (i32, i32) {
    %c0_i32 = arith.constant 0 : i32
    %c0_i32_0 = arith.constant 0 : i32
    %c0_i32_1 = arith.constant 0 : i32
    return %c0_i32, %c0_i32_0 : i32, i32
  }
  func.func @transform_3(%arg0: i32) -> (i32, i32) {
    %c0_i32 = arith.constant 0 : i32
    %c0_i32_0 = arith.constant 0 : i32
    %c0_i32_1 = arith.constant 0 : i32
    return %c0_i32, %c0_i32_0 : i32, i32
  }
  func.func @transform_4(%arg0: i32) -> (i32, i32) {
    %c0_i32 = arith.constant 0 : i32
    %c0_i32_0 = arith.constant 0 : i32
    %c0_i32_1 = arith.constant 0 : i32
    return %c0_i32, %c0_i32_0 : i32, i32
  }
  func.func @transform_5(%arg0: i32) -> (i32, i32) {
    %c0_i32 = arith.constant 0 : i32
    %c0_i32_0 = arith.constant 0 : i32
    return %arg0, %c0_i32 : i32, i32
  }
}

</mosaic_0001>

<llo_original>
// kernel: tpu_custom_call.1
$region0: #{tpu_custom_call.1}
  #allocation0 [shape = 'u32[]', space=smem, size = 0x4, offset = 0x4, fixed_abs, tag = 'smem constant byte address 0x4 - core index']
  #allocation1 [shape = 'u32[144,128]{1,0:T(1,128)}', space=vmem, size = 0x12000, scoped, tag = 'internal scratch']
  %s0 = inlined_call_operand.vmem [shape: f32[8,20], index: 0, kind: input, shape index: {}]
  %s1 = inlined_call_operand.vmem [shape: bf16[20,256], index: 1, kind: input, shape index: {}]
  %s2 = inlined_call_operand.vmem [shape: f32[1,256], index: 2, kind: input, shape index: {}]
  %s3 = inlined_call_operand.vmem [shape: bf16[256,784], index: 3, kind: input, shape index: {}]
  %s4 = inlined_call_operand.vmem [shape: f32[1,784], index: 4, kind: input, shape index: {}]
  %s5 = inlined_call_operand.hbm [shape: f32[8,784], index: 5, kind: output, shape index: {}]
  %s6 = sld [smem:[#allocation0]]
  $region30: #{tpu_custom_call.1} parent=0
    _
  %s8 = ssub.s32 1, %s6
  %s9 = scalar_select 0, %s8, %s6
  $region1: #{tpu_custom_call.1} parent=0
    #allocation2 [shape = 'u8[28672]{0}', space=vmem, size = 0x7000, scoped, tag = 'output window, operand 0, single buffered']
    #allocation3 [shape = 's32[1]{0}', space=sflag, size = 0x4, scoped, tag = 'scoped memory for tpu_custom_call.1']
    %10 = vsyncpa [#allocation3], 0
    // Predicated region
    $region2: #{tpu_custom_call.1} parent=1 // pred_check
      _
    $region3: #{tpu_custom_call.1} parent=1 // pred_check_branch
      %12 = sbr.rel (0) target = $region5
    $region4: #{tpu_custom_call.1} parent=1 // pred_region
      _
    $region5: #{tpu_custom_call.1} parent=1 // pred_fallthru
      _
    // Predicated region
    $region6: #{tpu_custom_call.1} parent=1 // pred_check
      _
    $region7: #{tpu_custom_call.1} parent=1 // pred_check_branch
      %14 = sbr.rel (0) target = $region9
    $region8: #{tpu_custom_call.1} parent=1 // pred_region
      _
    $region9: #{tpu_custom_call.1} parent=1 // pred_fallthru
      _
    // Predicated region
    $region10: #{tpu_custom_call.1} parent=1 // pred_check
      _
    $region11: #{tpu_custom_call.1} parent=1 // pred_check_branch
      %16 = sbr.rel (0) target = $region13
    $region12: #{tpu_custom_call.1} parent=1 // pred_region
      _
    $region13: #{tpu_custom_call.1} parent=1 // pred_fallthru
      _
    // Predicated region
    $region14: #{tpu_custom_call.1} parent=1 // pred_check
      _
    $region15: #{tpu_custom_call.1} parent=1 // pred_check_branch
      %18 = sbr.rel (0) target = $region17
    $region16: #{tpu_custom_call.1} parent=1 // pred_region
      _
    $region17: #{tpu_custom_call.1} parent=1 // pred_fallthru
      _
    // Predicated region
    $region18: #{tpu_custom_call.1} parent=1 // pred_check
      _
    $region19: #{tpu_custom_call.1} parent=1 // pred_check_branch
      %20 = sbr.rel (0) target = $region21
    $region20: #{tpu_custom_call.1} parent=1 // pred_region
      _
    $region21: #{tpu_custom_call.1} parent=1 // pred_fallthru
      _
    %v22 = vld [vmem:[%s0] sm:$0xff]
    %v23 = vpack.c.bf16 %v22, %v22
    %v24 = vld [vmem:[%s1] sm:$0xff]
    %v25 = vld [vmem:[%s1 + $0x8] sm:$0xff]
    %v26 = vld [vmem:[%s1 + $0x10] sm:$0x33]
    %v27 = vld [vmem:[%s2] sm:$0x3]
    %v29 = vlaneseq
    %v30 = vshrl.u32 %v29, 7
    %v31 = vsub.s32 0, %v30
    %v32 = vrot.slane %v27, %v31
    %v33 = vlaneseq
    %v34 = vshrl.u32 %v33, 7
    %v35 = vsub.s32 1, %v34
    %v36 = vrot.slane %v27, %v35
    %v42 = vunpack.c.l.b16 %v24
    %v43 = vunpack.c.h.b16 %v24
    %v44 = vunpack.c.l.b16 %v25
    %v45 = vunpack.c.h.b16 %v25
    %v46 = vunpack.c.l.b16 %v26
    %v47 = vunpack.c.h.b16 %v26
    %v48 = vpack.c.b16 %v44, %v42
    %v49 = vpack.c.b16 %v45, %v43
    %v50 = vpack.c.b16 %v46, %v46
    %v51 = vpack.c.b16 %v47, %v47
    %vm54 = vcmask 162816
    %v56 = vsel %vm54, %v23, 0
    %vm58 = vcmask 1041408
    %v60 = vsel %vm58, %v50, 0
    %v63 = vsel %vm58, %v51, 0
    %65 = vmatprep.subr.bf16.mxu0 0
    %66 = vmatpush1.bf16.msra.mxu0 0
    %67 = vmatprep.subr.bf16.mxu0 0
    %68 = vmatpush1.bf16.msra.mxu0 0
    %69 = vmatprep.subr.bf16.mxu0 0
    %70 = vmatpush1.bf16.msra.mxu0 0
    %71 = vmatprep.subr.bf16.mxu0 0
    %72 = vmatpush1.bf16.msra.mxu0 0
    %73 = vmatprep.subr.bf16.mxu0 0
    %74 = vmatpush1.bf16.msra.mxu0 0
    %75 = vmatprep.subr.bf16.mxu0 0
    %76 = vmatpush1.bf16.msra.mxu0 0
    %77 = vmatprep.subr.bf16.mxu0 %v63
    %78 = vmatpush1.bf16.msra.mxu0 %v60
    %79 = vmatprep.subr.bf16.mxu0 %v49
    %80 = vmatpush1.bf16.msra.mxu0 %v48
    %81 = vmatprep.subr.bf16.mxu0 0
    %82 = vmatpush2.bf16.msra.mxu0 0
    %83 = vmatprep.subr.bf16.mxu0 0
    %84 = vmatpush2.bf16.msra.mxu0 0
    %85 = vmatprep.subr.bf16.mxu0 0
    %86 = vmatpush2.bf16.msra.mxu0 0
    %87 = vmatprep.subr.bf16.mxu0 0
    %88 = vmatpush2.bf16.msra.mxu0 0
    %89 = vmatprep.subr.bf16.mxu0 0
    %90 = vmatpush2.bf16.msra.mxu0 0
    %91 = vmatprep.subr.bf16.mxu0 0
    %92 = vmatpush2.bf16.msra.mxu0 0
    %93 = vmatprep.subr.bf16.mxu0 0
    %94 = vmatpush2.bf16.msra.mxu0 0
    %95 = vmatprep.subr.bf16.mxu0 0
    %96 = vmatpush2.bf16.msra.mxu0 0
    %97 = vmatprep.mubr.bf16.mxu0 0
    %98 = vmatmul.mubr.bf16.gmra.mxu0 %v56
    %v99 = vpop.f32.mrf.mxu0
    %v100 = vadd.f32 %v32, %v99
    %v101 = vpop.f32.mrf.mxu0
    %v102 = vadd.f32 %v36, %v101
    %v103 = vpop.f32.mrf.mxu0
    %v104 = vpop.f32.mrf.mxu0
    %105 = vdwg.mxu0
    %v106 = vmax.f32 %v100, 0.0
    %v107 = vmax.f32 %v102, 0.0
    %v108 = vpack.c.bf16 %v106, %v106
    %v109 = vpack.c.bf16 %v107, %v107
    %v110 = vld [vmem:[%s3] sm:$0xff]
    %v111 = vld [vmem:[%s3 + $0x8] sm:$0xff]
    %v112 = vld [vmem:[%s3 + $0x10] sm:$0xff]
    %v113 = vld [vmem:[%s3 + $0x18] sm:$0xf]
    %v114 = vld [vmem:[%s3 + $0x1c] sm:$0xff]
    %v115 = vld [vmem:[%s3 + $0x24] sm:$0xff]
    %v116 = vld [vmem:[%s3 + $0x2c] sm:$0xff]
    %v117 = vld [vmem:[%s3 + $0x34] sm:$0xf]
    %v118 = vld [vmem:[%s3 + $0x38] sm:$0xff]
    %v119 = vld [vmem:[%s3 + $0x40] sm:$0xff]
    %v120 = vld [vmem:[%s3 + $0x48] sm:$0xff]
    %v121 = vld [vmem:[%s3 + $0x50] sm:$0xf]
    %v122 = vld [vmem:[%s3 + $0x54] sm:$0xff]
    %v123 = vld [vmem:[%s3 + $0x5c] sm:$0xff]
    %v124 = vld [vmem:[%s3 + $0x64] sm:$0xff]
    %v125 = vld [vmem:[%s3 + $0x6c] sm:$0xf]
    %v126 = vld [vmem:[%s3 + $0x70] sm:$0xff]
    %v127 = vld [vmem:[%s3 + $0x78] sm:$0xff]
    %v128 = vld [vmem:[%s3 + $0x80] sm:$0xff]
    %v129 = vld [vmem:[%s3 + $0x88] sm:$0xf]
    %v130 = vld [vmem:[%s3 + $0x8c] sm:$0xff]
    %v131 = vld [vmem:[%s3 + $0x94] sm:$0xff]
    %v132 = vld [vmem:[%s3 + $0x9c] sm:$0xff]
    %v133 = vld [vmem:[%s3 + $0xa4] sm:$0xf]
    %v134 = vld [vmem:[%s3 + $0xa8] sm:$0xff]
    %v135 = vld [vmem:[%s3 + $0xb0] sm:$0xff]
    %v136 = vld [vmem:[%s3 + $0xb8] sm:$0xff]
    %v137 = vld [vmem:[%s3 + $0xc0] sm:$0xf]
    %v138 = vld [vmem:[%s3 + $0xc4] sm:$0xff]
    %v139 = vld [vmem:[%s3 + $0xcc] sm:$0xff]
    %v140 = vld [vmem:[%s3 + $0xd4] sm:$0xff]
    %v141 = vld [vmem:[%s3 + $0xdc] sm:$0xf]
    %v142 = vld [vmem:[%s3 + $0xe0] sm:$0xff]
    %v143 = vld [vmem:[%s3 + $0xe8] sm:$0xff]
    %v144 = vld [vmem:[%s3 + $0xf0] sm:$0xff]
    %v145 = vld [vmem:[%s3 + $0xf8] sm:$0xf]
    %v146 = vld [vmem:[%s3 + $0xfc] sm:$0xff]
    %v147 = vld [vmem:[%s3 + $0x104] sm:$0xff]
    %v148 = vld [vmem:[%s3 + $0x10c] sm:$0xff]
    %v149 = vld [vmem:[%s3 + $0x114] sm:$0xf]
    %v150 = vld [vmem:[%s3 + $0x118] sm:$0xff]
    %v151 = vld [vmem:[%s3 + $0x120] sm:$0xff]
    %v152 = vld [vmem:[%s3 + $0x128] sm:$0xff]
    %v153 = vld [vmem:[%s3 + $0x130] sm:$0xf]
    %v154 = vld [vmem:[%s3 + $0x134] sm:$0xff]
    %v155 = vld [vmem:[%s3 + $0x13c] sm:$0xff]
    %v156 = vld [vmem:[%s3 + $0x144] sm:$0xff]
    %v157 = vld [vmem:[%s3 + $0x14c] sm:$0xf]
    %v158 = vld [vmem:[%s3 + $0x150] sm:$0xff]
    %v159 = vld [vmem:[%s3 + $0x158] sm:$0xff]
    %v160 = vld [vmem:[%s3 + $0x160] sm:$0xff]
    %v161 = vld [vmem:[%s3 + $0x168] sm:$0xf]
    %v162 = vld [vmem:[%s3 + $0x16c] sm:$0xff]
    %v163 = vld [vmem:[%s3 + $0x174] sm:$0xff]
    %v164 = vld [vmem:[%s3 + $0x17c] sm:$0xff]
    %v165 = vld [vmem:[%s3 + $0x184] sm:$0xf]
    %v166 = vld [vmem:[%s3 + $0x188] sm:$0xff]
    %v167 = vld [vmem:[%s3 + $0x190] sm:$0xff]
    %v168 = vld [vmem:[%s3 + $0x198] sm:$0xff]
    %v169 = vld [vmem:[%s3 + $0x1a0] sm:$0xf]
    %v170 = vld [vmem:[%s3 + $0x1a4] sm:$0xff]
    %v171 = vld [vmem:[%s3 + $0x1ac] sm:$0xff]
    %v172 = vld [vmem:[%s3 + $0x1b4] sm:$0xff]
    %v173 = vld [vmem:[%s3 + $0x1bc] sm:$0xf]
    %v174 = vld [vmem:[%s3 + $0x1c0] sm:$0xff]
    %v175 = vld [vmem:[%s3 + $0x1c8] sm:$0xff]
    %v176 = vld [vmem:[%s3 + $0x1d0] sm:$0xff]
    %v177 = vld [vmem:[%s3 + $0x1d8] sm:$0xf]
    %v178 = vld [vmem:[%s3 + $0x1dc] sm:$0xff]
    %v179 = vld [vmem:[%s3 + $0x1e4] sm:$0xff]
    %v180 = vld [vmem:[%s3 + $0x1ec] sm:$0xff]
    %v181 = vld [vmem:[%s3 + $0x1f4] sm:$0xf]
    %v182 = vld [vmem:[%s3 + $0x1f8] sm:$0xff]
    %v183 = vld [vmem:[%s3 + $0x200] sm:$0xff]
    %v184 = vld [vmem:[%s3 + $0x208] sm:$0xff]
    %v185 = vld [vmem:[%s3 + $0x210] sm:$0xf]
    %v186 = vld [vmem:[%s3 + $0x214] sm:$0xff]
    %v187 = vld [vmem:[%s3 + $0x21c] sm:$0xff]
    %v188 = vld [vmem:[%s3 + $0x224] sm:$0xff]
    %v189 = vld [vmem:[%s3 + $0x22c] sm:$0xf]
    %v190 = vld [vmem:[%s3 + $0x230] sm:$0xff]
    %v191 = vld [vmem:[%s3 + $0x238] sm:$0xff]
    %v192 = vld [vmem:[%s3 + $0x240] sm:$0xff]
    %v193 = vld [vmem:[%s3 + $0x248] sm:$0xf]
    %v194 = vld [vmem:[%s3 + $0x24c] sm:$0xff]
    %v195 = vld [vmem:[%s3 + $0x254] sm:$0xff]
    %v196 = vld [vmem:[%s3 + $0x25c] sm:$0xff]
    %v197 = vld [vmem:[%s3 + $0x264] sm:$0xf]
    %v198 = vld [vmem:[%s3 + $0x268] sm:$0xff]
    %v199 = vld [vmem:[%s3 + $0x270] sm:$0xff]
    %v200 = vld [vmem:[%s3 + $0x278] sm:$0xff]
    %v201 = vld [vmem:[%s3 + $0x280] sm:$0xf]
    %v202 = vld [vmem:[%s3 + $0x284] sm:$0xff]
    %v203 = vld [vmem:[%s3 + $0x28c] sm:$0xff]
    %v204 = vld [vmem:[%s3 + $0x294] sm:$0xff]
    %v205 = vld [vmem:[%s3 + $0x29c] sm:$0xf]
    %v206 = vld [vmem:[%s3 + $0x2a0] sm:$0xff]
    %v207 = vld [vmem:[%s3 + $0x2a8] sm:$0xff]
    %v208 = vld [vmem:[%s3 + $0x2b0] sm:$0xff]
    %v209 = vld [vmem:[%s3 + $0x2b8] sm:$0xf]
    %v210 = vld [vmem:[%s3 + $0x2bc] sm:$0xff]
    %v211 = vld [vmem:[%s3 + $0x2c4] sm:$0xff]
    %v212 = vld [vmem:[%s3 + $0x2cc] sm:$0xff]
    %v213 = vld [vmem:[%s3 + $0x2d4] sm:$0xf]
    %v214 = vld [vmem:[%s3 + $0x2d8] sm:$0xff]
    %v215 = vld [vmem:[%s3 + $0x2e0] sm:$0xff]
    %v216 = vld [vmem:[%s3 + $0x2e8] sm:$0xff]
    %v217 = vld [vmem:[%s3 + $0x2f0] sm:$0xf]
    %v218 = vld [vmem:[%s3 + $0x2f4] sm:$0xff]
    %v219 = vld [vmem:[%s3 + $0x2fc] sm:$0xff]
    %v220 = vld [vmem:[%s3 + $0x304] sm:$0xff]
    %v221 = vld [vmem:[%s3 + $0x30c] sm:$0xf]
    %v222 = vld [vmem:[%s3 + $0x310] sm:$0xff]
    %v223 = vld [vmem:[%s3 + $0x318] sm:$0xff]
    %v224 = vld [vmem:[%s3 + $0x320] sm:$0xff]
    %v225 = vld [vmem:[%s3 + $0x328] sm:$0xf]
    %v226 = vld [vmem:[%s3 + $0x32c] sm:$0xff]
    %v227 = vld [vmem:[%s3 + $0x334] sm:$0xff]
    %v228 = vld [vmem:[%s3 + $0x33c] sm:$0xff]
    %v229 = vld [vmem:[%s3 + $0x344] sm:$0xf]
    %v230 = vld [vmem:[%s3 + $0x348] sm:$0xff]
    %v231 = vld [vmem:[%s3 + $0x350] sm:$0xff]
    %v232 = vld [vmem:[%s3 + $0x358] sm:$0xff]
    %v233 = vld [vmem:[%s3 + $0x360] sm:$0xf]
    %v234 = vld [vmem:[%s3 + $0x364] sm:$0xff]
    %v235 = vld [vmem:[%s3 + $0x36c] sm:$0xff]
    %v236 = vld [vmem:[%s3 + $0x374] sm:$0xff]
    %v237 = vld [vmem:[%s3 + $0x37c] sm:$0xf]
    %v238 = vld [vmem:[%s4] sm:$0x7f]
    %v240 = vlaneseq
    %v241 = vshrl.u32 %v240, 7
    %v242 = vsub.s32 0, %v241
    %v243 = vrot.slane %v238, %v242
    %v244 = vlaneseq
    %v245 = vshrl.u32 %v244, 7
    %v246 = vsub.s32 1, %v245
    %v247 = vrot.slane %v238, %v246
    %v248 = vlaneseq
    %v249 = vshrl.u32 %v248, 7
    %v250 = vsub.s32 2, %v249
    %v251 = vrot.slane %v238, %v250
    %v252 = vlaneseq
    %v253 = vshrl.u32 %v252, 7
    %v254 = vsub.s32 3, %v253
    %v255 = vrot.slane %v238, %v254
    %v256 = vlaneseq
    %v257 = vshrl.u32 %v256, 7
    %v258 = vsub.s32 4, %v257
    %v259 = vrot.slane %v238, %v258
    %v260 = vlaneseq
    %v261 = vshrl.u32 %v260, 7
    %v262 = vsub.s32 5, %v261
    %v263 = vrot.slane %v238, %v262
    %v264 = vlaneseq
    %v265 = vshrl.u32 %v264, 7
    %v266 = vsub.s32 6, %v265
    %v267 = vrot.slane %v238, %v266
    %v403 = vunpack.c.l.b16 %v110
    %v404 = vunpack.c.h.b16 %v110
    %v405 = vunpack.c.l.b16 %v111
    %v406 = vunpack.c.h.b16 %v111
    %v407 = vunpack.c.l.b16 %v112
    %v408 = vunpack.c.h.b16 %v112
    %v409 = vunpack.c.l.b16 %v113
    %v410 = vunpack.c.l.b16 %v114
    %v411 = vunpack.c.h.b16 %v114
    %v412 = vunpack.c.l.b16 %v115
    %v413 = vunpack.c.h.b16 %v115
    %v414 = vunpack.c.l.b16 %v116
    %v415 = vunpack.c.h.b16 %v116
    %v416 = vunpack.c.l.b16 %v117
    %v417 = vunpack.c.l.b16 %v118
    %v418 = vunpack.c.h.b16 %v118
    %v419 = vunpack.c.l.b16 %v119
    %v420 = vunpack.c.h.b16 %v119
    %v421 = vunpack.c.l.b16 %v120
    %v422 = vunpack.c.h.b16 %v120
    %v423 = vunpack.c.l.b16 %v121
    %v424 = vunpack.c.l.b16 %v122
    %v425 = vunpack.c.h.b16 %v122
    %v426 = vunpack.c.l.b16 %v123
    %v427 = vunpack.c.h.b16 %v123
    %v428 = vunpack.c.l.b16 %v124
    %v429 = vunpack.c.h.b16 %v124
    %v430 = vunpack.c.l.b16 %v125
    %v431 = vunpack.c.l.b16 %v126
    %v432 = vunpack.c.h.b16 %v126
    %v433 = vunpack.c.l.b16 %v127
    %v434 = vunpack.c.h.b16 %v127
    %v435 = vunpack.c.l.b16 %v128
    %v436 = vunpack.c.h.b16 %v128
    %v437 = vunpack.c.l.b16 %v129
    %v438 = vunpack.c.l.b16 %v130
    %v439 = vunpack.c.h.b16 %v130
    %v440 = vunpack.c.l.b16 %v131
    %v441 = vunpack.c.h.b16 %v131
    %v442 = vunpack.c.l.b16 %v132
    %v443 = vunpack.c.h.b16 %v132
    %v444 = vunpack.c.l.b16 %v133
    %v445 = vunpack.c.l.b16 %v134
    %v446 = vunpack.c.h.b16 %v134
    %v447 = vunpack.c.l.b16 %v135
    %v448 = vunpack.c.h.b16 %v135
    %v449 = vunpack.c.l.b16 %v136
    %v450 = vunpack.c.h.b16 %v136
    %v451 = vunpack.c.l.b16 %v137
    %v452 = vunpack.c.l.b16 %v138
    %v453 = vunpack.c.h.b16 %v138
    %v454 = vunpack.c.l.b16 %v139
    %v455 = vunpack.c.h.b16 %v139
    %v456 = vunpack.c.l.b16 %v140
    %v457 = vunpack.c.h.b16 %v140
    %v458 = vunpack.c.l.b16 %v141
    %v459 = vunpack.c.l.b16 %v142
    %v460 = vunpack.c.h.b16 %v142
    %v461 = vunpack.c.l.b16 %v143
    %v462 = vunpack.c.h.b16 %v143
    %v463 = vunpack.c.l.b16 %v144
    %v464 = vunpack.c.h.b16 %v144
    %v465 = vunpack.c.l.b16 %v145
    %v466 = vunpack.c.l.b16 %v146
    %v467 = vunpack.c.h.b16 %v146
    %v468 = vunpack.c.l.b16 %v147
    %v469 = vunpack.c.h.b16 %v147
    %v470 = vunpack.c.l.b16 %v148
    %v471 = vunpack.c.h.b16 %v148
    %v472 = vunpack.c.l.b16 %v149
    %v473 = vunpack.c.l.b16 %v150
    %v474 = vunpack.c.h.b16 %v150
    %v475 = vunpack.c.l.b16 %v151
    %v476 = vunpack.c.h.b16 %v151
    %v477 = vunpack.c.l.b16 %v152
    %v478 = vunpack.c.h.b16 %v152
    %v479 = vunpack.c.l.b16 %v153
    %v480 = vunpack.c.l.b16 %v154
    %v481 = vunpack.c.h.b16 %v154
    %v482 = vunpack.c.l.b16 %v155
    %v483 = vunpack.c.h.b16 %v155
    %v484 = vunpack.c.l.b16 %v156
    %v485 = vunpack.c.h.b16 %v156
    %v486 = vunpack.c.l.b16 %v157
    %v487 = vunpack.c.l.b16 %v158
    %v488 = vunpack.c.h.b16 %v158
    %v489 = vunpack.c.l.b16 %v159
    %v490 = vunpack.c.h.b16 %v159
    %v491 = vunpack.c.l.b16 %v160
    %v492 = vunpack.c.h.b16 %v160
    %v493 = vunpack.c.l.b16 %v161
    %v494 = vunpack.c.l.b16 %v162
    %v495 = vunpack.c.h.b16 %v162
    %v496 = vunpack.c.l.b16 %v163
    %v497 = vunpack.c.h.b16 %v163
    %v498 = vunpack.c.l.b16 %v164
    %v499 = vunpack.c.h.b16 %v164
    %v500 = vunpack.c.l.b16 %v165
    %v501 = vunpack.c.l.b16 %v166
    %v502 = vunpack.c.h.b16 %v166
    %v503 = vunpack.c.l.b16 %v167
    %v504 = vunpack.c.h.b16 %v167
    %v505 = vunpack.c.l.b16 %v168
    %v506 = vunpack.c.h.b16 %v168
    %v507 = vunpack.c.l.b16 %v169
    %v508 = vunpack.c.l.b16 %v170
    %v509 = vunpack.c.h.b16 %v170
    %v510 = vunpack.c.l.b16 %v171
    %v511 = vunpack.c.h.b16 %v171
    %v512 = vunpack.c.l.b16 %v172
    %v513 = vunpack.c.h.b16 %v172
    %v514 = vunpack.c.l.b16 %v173
    %v515 = vunpack.c.l.b16 %v174
    %v516 = vunpack.c.h.b16 %v174
    %v517 = vunpack.c.l.b16 %v175
    %v518 = vunpack.c.h.b16 %v175
    %v519 = vunpack.c.l.b16 %v176
    %v520 = vunpack.c.h.b16 %v176
    %v521 = vunpack.c.l.b16 %v177
    %v522 = vunpack.c.l.b16 %v178
    %v523 = vunpack.c.h.b16 %v178
    %v524 = vunpack.c.l.b16 %v179
    %v525 = vunpack.c.h.b16 %v179
    %v526 = vunpack.c.l.b16 %v180
    %v527 = vunpack.c.h.b16 %v180
    %v528 = vunpack.c.l.b16 %v181
    %v529 = vunpack.c.l.b16 %v182
    %v530 = vunpack.c.h.b16 %v182
    %v531 = vunpack.c.l.b16 %v183
    %v532 = vunpack.c.h.b16 %v183
    %v533 = vunpack.c.l.b16 %v184
    %v534 = vunpack.c.h.b16 %v184
    %v535 = vunpack.c.l.b16 %v185
    %v536 = vunpack.c.l.b16 %v186
    %v537 = vunpack.c.h.b16 %v186
    %v538 = vunpack.c.l.b16 %v187
    %v539 = vunpack.c.h.b16 %v187
    %v540 = vunpack.c.l.b16 %v188
    %v541 = vunpack.c.h.b16 %v188
    %v542 = vunpack.c.l.b16 %v189
    %v543 = vunpack.c.l.b16 %v190
    %v544 = vunpack.c.h.b16 %v190
    %v545 = vunpack.c.l.b16 %v191
    %v546 = vunpack.c.h.b16 %v191
    %v547 = vunpack.c.l.b16 %v192
    %v548 = vunpack.c.h.b16 %v192
    %v549 = vunpack.c.l.b16 %v193
    %v550 = vunpack.c.l.b16 %v194
    %v551 = vunpack.c.h.b16 %v194
    %v552 = vunpack.c.l.b16 %v195
    %v553 = vunpack.c.h.b16 %v195
    %v554 = vunpack.c.l.b16 %v196
    %v555 = vunpack.c.h.b16 %v196
    %v556 = vunpack.c.l.b16 %v197
    %v557 = vunpack.c.l.b16 %v198
    %v558 = vunpack.c.h.b16 %v198
    %v559 = vunpack.c.l.b16 %v199
    %v560 = vunpack.c.h.b16 %v199
    %v561 = vunpack.c.l.b16 %v200
    %v562 = vunpack.c.h.b16 %v200
    %v563 = vunpack.c.l.b16 %v201
    %v564 = vunpack.c.l.b16 %v202
    %v565 = vunpack.c.h.b16 %v202
    %v566 = vunpack.c.l.b16 %v203
    %v567 = vunpack.c.h.b16 %v203
    %v568 = vunpack.c.l.b16 %v204
    %v569 = vunpack.c.h.b16 %v204
    %v570 = vunpack.c.l.b16 %v205
    %v571 = vunpack.c.l.b16 %v206
    %v572 = vunpack.c.h.b16 %v206
    %v573 = vunpack.c.l.b16 %v207
    %v574 = vunpack.c.h.b16 %v207
    %v575 = vunpack.c.l.b16 %v208
    %v576 = vunpack.c.h.b16 %v208
    %v577 = vunpack.c.l.b16 %v209
    %v578 = vunpack.c.l.b16 %v210
    %v579 = vunpack.c.h.b16 %v210
    %v580 = vunpack.c.l.b16 %v211
    %v581 = vunpack.c.h.b16 %v211
    %v582 = vunpack.c.l.b16 %v212
    %v583 = vunpack.c.h.b16 %v212
    %v584 = vunpack.c.l.b16 %v213
    %v585 = vunpack.c.l.b16 %v214
    %v586 = vunpack.c.h.b16 %v214
    %v587 = vunpack.c.l.b16 %v215
    %v588 = vunpack.c.h.b16 %v215
    %v589 = vunpack.c.l.b16 %v216
    %v590 = vunpack.c.h.b16 %v216
    %v591 = vunpack.c.l.b16 %v217
    %v592 = vunpack.c.l.b16 %v218
    %v593 = vunpack.c.h.b16 %v218
    %v594 = vunpack.c.l.b16 %v219
    %v595 = vunpack.c.h.b16 %v219
    %v596 = vunpack.c.l.b16 %v220
    %v597 = vunpack.c.h.b16 %v220
    %v598 = vunpack.c.l.b16 %v221
    %v599 = vunpack.c.l.b16 %v222
    %v600 = vunpack.c.h.b16 %v222
    %v601 = vunpack.c.l.b16 %v223
    %v602 = vunpack.c.h.b16 %v223
    %v603 = vunpack.c.l.b16 %v224
    %v604 = vunpack.c.h.b16 %v224
    %v605 = vunpack.c.l.b16 %v225
    %v606 = vunpack.c.l.b16 %v226
    %v607 = vunpack.c.h.b16 %v226
    %v608 = vunpack.c.l.b16 %v227
    %v609 = vunpack.c.h.b16 %v227
    %v610 = vunpack.c.l.b16 %v228
    %v611 = vunpack.c.h.b16 %v228
    %v612 = vunpack.c.l.b16 %v229
    %v613 = vunpack.c.l.b16 %v230
    %v614 = vunpack.c.h.b16 %v230
    %v615 = vunpack.c.l.b16 %v231
    %v616 = vunpack.c.h.b16 %v231
    %v617 = vunpack.c.l.b16 %v232
    %v618 = vunpack.c.h.b16 %v232
    %v619 = vunpack.c.l.b16 %v233
    %v620 = vunpack.c.l.b16 %v234
    %v621 = vunpack.c.h.b16 %v234
    %v622 = vunpack.c.l.b16 %v235
    %v623 = vunpack.c.h.b16 %v235
    %v624 = vunpack.c.l.b16 %v236
    %v625 = vunpack.c.h.b16 %v236
    %v626 = vunpack.c.l.b16 %v237
    %v627 = vpack.c.b16 %v410, %v403
    %v628 = vpack.c.b16 %v411, %v404
    %v629 = vpack.c.b16 %v412, %v405
    %v630 = vpack.c.b16 %v413, %v406
    %v631 = vpack.c.b16 %v414, %v407
    %v632 = vpack.c.b16 %v415, %v408
    %v633 = vpack.c.b16 %v416, %v409
    %v634 = vpack.c.b16 %v424, %v417
    %v635 = vpack.c.b16 %v425, %v418
    %v636 = vpack.c.b16 %v426, %v419
    %v637 = vpack.c.b16 %v427, %v420
    %v638 = vpack.c.b16 %v428, %v421
    %v639 = vpack.c.b16 %v429, %v422
    %v640 = vpack.c.b16 %v430, %v423
    %v641 = vpack.c.b16 %v438, %v431
    %v642 = vpack.c.b16 %v439, %v432
    %v643 = vpack.c.b16 %v440, %v433
    %v644 = vpack.c.b16 %v441, %v434
    %v645 = vpack.c.b16 %v442, %v435
    %v646 = vpack.c.b16 %v443, %v436
    %v647 = vpack.c.b16 %v444, %v437
    %v648 = vpack.c.b16 %v452, %v445
    %v649 = vpack.c.b16 %v453, %v446
    %v650 = vpack.c.b16 %v454, %v447
    %v651 = vpack.c.b16 %v455, %v448
    %v652 = vpack.c.b16 %v456, %v449
    %v653 = vpack.c.b16 %v457, %v450
    %v654 = vpack.c.b16 %v458, %v451
    %v655 = vpack.c.b16 %v466, %v459
    %v656 = vpack.c.b16 %v467, %v460
    %v657 = vpack.c.b16 %v468, %v461
    %v658 = vpack.c.b16 %v469, %v462
    %v659 = vpack.c.b16 %v470, %v463
    %v660 = vpack.c.b16 %v471, %v464
    %v661 = vpack.c.b16 %v472, %v465
    %v662 = vpack.c.b16 %v480, %v473
    %v663 = vpack.c.b16 %v481, %v474
    %v664 = vpack.c.b16 %v482, %v475
    %v665 = vpack.c.b16 %v483, %v476
    %v666 = vpack.c.b16 %v484, %v477
    %v667 = vpack.c.b16 %v485, %v478
    %v668 = vpack.c.b16 %v486, %v479
    %v669 = vpack.c.b16 %v494, %v487
    %v670 = vpack.c.b16 %v495, %v488
    %v671 = vpack.c.b16 %v496, %v489
    %v672 = vpack.c.b16 %v497, %v490
    %v673 = vpack.c.b16 %v498, %v491
    %v674 = vpack.c.b16 %v499, %v492
    %v675 = vpack.c.b16 %v500, %v493
    %v676 = vpack.c.b16 %v508, %v501
    %v677 = vpack.c.b16 %v509, %v502
    %v678 = vpack.c.b16 %v510, %v503
    %v679 = vpack.c.b16 %v511, %v504
    %v680 = vpack.c.b16 %v512, %v505
    %v681 = vpack.c.b16 %v513, %v506
    %v682 = vpack.c.b16 %v514, %v507
    %v683 = vpack.c.b16 %v522, %v515
    %v684 = vpack.c.b16 %v523, %v516
    %v685 = vpack.c.b16 %v524, %v517
    %v686 = vpack.c.b16 %v525, %v518
    %v687 = vpack.c.b16 %v526, %v519
    %v688 = vpack.c.b16 %v527, %v520
    %v689 = vpack.c.b16 %v528, %v521
    %v690 = vpack.c.b16 %v536, %v529
    %v691 = vpack.c.b16 %v537, %v530
    %v692 = vpack.c.b16 %v538, %v531
    %v693 = vpack.c.b16 %v539, %v532
    %v694 = vpack.c.b16 %v540, %v533
    %v695 = vpack.c.b16 %v541, %v534
    %v696 = vpack.c.b16 %v542, %v535
    %v697 = vpack.c.b16 %v550, %v543
    %v698 = vpack.c.b16 %v551, %v544
    %v699 = vpack.c.b16 %v552, %v545
    %v700 = vpack.c.b16 %v553, %v546
    %v701 = vpack.c.b16 %v554, %v547
    %v702 = vpack.c.b16 %v555, %v548
    %v703 = vpack.c.b16 %v556, %v549
    %v704 = vpack.c.b16 %v564, %v557
    %v705 = vpack.c.b16 %v565, %v558
    %v706 = vpack.c.b16 %v566, %v559
    %v707 = vpack.c.b16 %v567, %v560
    %v708 = vpack.c.b16 %v568, %v561
    %v709 = vpack.c.b16 %v569, %v562
    %v710 = vpack.c.b16 %v570, %v563
    %v711 = vpack.c.b16 %v578, %v571
    %v712 = vpack.c.b16 %v579, %v572
    %v713 = vpack.c.b16 %v580, %v573
    %v714 = vpack.c.b16 %v581, %v574
    %v715 = vpack.c.b16 %v582, %v575
    %v716 = vpack.c.b16 %v583, %v576
    %v717 = vpack.c.b16 %v584, %v577
    %v718 = vpack.c.b16 %v592, %v585
    %v719 = vpack.c.b16 %v593, %v586
    %v720 = vpack.c.b16 %v594, %v587
    %v721 = vpack.c.b16 %v595, %v588
    %v722 = vpack.c.b16 %v596, %v589
    %v723 = vpack.c.b16 %v597, %v590
    %v724 = vpack.c.b16 %v598, %v591
    %v725 = vpack.c.b16 %v606, %v599
    %v726 = vpack.c.b16 %v607, %v600
    %v727 = vpack.c.b16 %v608, %v601
    %v728 = vpack.c.b16 %v609, %v602
    %v729 = vpack.c.b16 %v610, %v603
    %v730 = vpack.c.b16 %v611, %v604
    %v731 = vpack.c.b16 %v612, %v605
    %v732 = vpack.c.b16 %v620, %v613
    %v733 = vpack.c.b16 %v621, %v614
    %v734 = vpack.c.b16 %v622, %v615
    %v735 = vpack.c.b16 %v623, %v616
    %v736 = vpack.c.b16 %v624, %v617
    %v737 = vpack.c.b16 %v625, %v618
    %v738 = vpack.c.b16 %v626, %v619
    %851 = vmatprep.subr.bf16.mxu0 %v677
    %852 = vmatpush1.bf16.msra.mxu0 %v676
    %853 = vmatprep.subr.bf16.mxu0 %v670
    %854 = vmatpush1.bf16.msra.mxu0 %v669
    %855 = vmatprep.subr.bf16.mxu0 %v663
    %856 = vmatpush1.bf16.msra.mxu0 %v662
    %857 = vmatprep.subr.bf16.mxu0 %v656
    %858 = vmatpush1.bf16.msra.mxu0 %v655
    %859 = vmatprep.subr.bf16.mxu0 %v649
    %860 = vmatpush1.bf16.msra.mxu0 %v648
    %861 = vmatprep.subr.bf16.mxu0 %v642
    %862 = vmatpush1.bf16.msra.mxu0 %v641
    %863 = vmatprep.subr.bf16.mxu0 %v635
    %864 = vmatpush1.bf16.msra.mxu0 %v634
    %865 = vmatprep.subr.bf16.mxu0 %v628
    %866 = vmatpush1.bf16.msra.mxu0 %v627
    %867 = vmatprep.subr.bf16.mxu0 %v733
    %868 = vmatpush2.bf16.msra.mxu0 %v732
    %869 = vmatprep.subr.bf16.mxu0 %v726
    %870 = vmatpush2.bf16.msra.mxu0 %v725
    %871 = vmatprep.subr.bf16.mxu0 %v719
    %872 = vmatpush2.bf16.msra.mxu0 %v718
    %873 = vmatprep.subr.bf16.mxu0 %v712
    %874 = vmatpush2.bf16.msra.mxu0 %v711
    %875 = vmatprep.subr.bf16.mxu0 %v705
    %876 = vmatpush2.bf16.msra.mxu0 %v704
    %877 = vmatprep.subr.bf16.mxu0 %v698
    %878 = vmatpush2.bf16.msra.mxu0 %v697
    %879 = vmatprep.subr.bf16.mxu0 %v691
    %880 = vmatpush2.bf16.msra.mxu0 %v690
    %881 = vmatprep.subr.bf16.mxu0 %v684
    %882 = vmatpush2.bf16.msra.mxu0 %v683
    %883 = vmatprep.mubr.bf16.mxu0 %v109
    %884 = vmatmul.mubr.bf16.gmra.mxu0 %v108
    %v885 = vpop.f32.mrf.mxu0
    %v886 = vadd.f32 %v243, %v885
    %v887 = vpop.f32.mrf.mxu0
    %v888 = vadd.f32 %v247, %v887
    %v889 = vpop.f32.mrf.mxu0
    %v890 = vpop.f32.mrf.mxu0
    %891 = vdwg.mxu0
    %892 = vmatprep.subr.bf16.mxu0 %v679
    %893 = vmatpush1.bf16.msra.mxu0 %v678
    %894 = vmatprep.subr.bf16.mxu0 %v672
    %895 = vmatpush1.bf16.msra.mxu0 %v671
    %896 = vmatprep.subr.bf16.mxu0 %v665
    %897 = vmatpush1.bf16.msra.mxu0 %v664
    %898 = vmatprep.subr.bf16.mxu0 %v658
    %899 = vmatpush1.bf16.msra.mxu0 %v657
    %900 = vmatprep.subr.bf16.mxu0 %v651
    %901 = vmatpush1.bf16.msra.mxu0 %v650
    %902 = vmatprep.subr.bf16.mxu0 %v644
    %903 = vmatpush1.bf16.msra.mxu0 %v643
    %904 = vmatprep.subr.bf16.mxu0 %v637
    %905 = vmatpush1.bf16.msra.mxu0 %v636
    %906 = vmatprep.subr.bf16.mxu0 %v630
    %907 = vmatpush1.bf16.msra.mxu0 %v629
    %908 = vmatprep.subr.bf16.mxu0 %v735
    %909 = vmatpush2.bf16.msra.mxu0 %v734
    %910 = vmatprep.subr.bf16.mxu0 %v728
    %911 = vmatpush2.bf16.msra.mxu0 %v727
    %912 = vmatprep.subr.bf16.mxu0 %v721
    %913 = vmatpush2.bf16.msra.mxu0 %v720
    %914 = vmatprep.subr.bf16.mxu0 %v714
    %915 = vmatpush2.bf16.msra.mxu0 %v713
    %916 = vmatprep.subr.bf16.mxu0 %v707
    %917 = vmatpush2.bf16.msra.mxu0 %v706
    %918 = vmatprep.subr.bf16.mxu0 %v700
    %919 = vmatpush2.bf16.msra.mxu0 %v699
    %920 = vmatprep.subr.bf16.mxu0 %v693
    %921 = vmatpush2.bf16.msra.mxu0 %v692
    %922 = vmatprep.subr.bf16.mxu0 %v686
    %923 = vmatpush2.bf16.msra.mxu0 %v685
    %924 = vmatprep.mubr.bf16.mxu0 %v109
    %925 = vmatmul.mubr.bf16.gmra.mxu0 %v108
    %v926 = vpop.f32.mrf.mxu0
    %v927 = vadd.f32 %v251, %v926
    %v928 = vpop.f32.mrf.mxu0
    %v929 = vadd.f32 %v255, %v928
    %v930 = vpop.f32.mrf.mxu0
    %v931 = vpop.f32.mrf.mxu0
    %932 = vdwg.mxu0
    %933 = vmatprep.subr.bf16.mxu0 %v681
    %934 = vmatpush1.bf16.msra.mxu0 %v680
    %935 = vmatprep.subr.bf16.mxu0 %v674
    %936 = vmatpush1.bf16.msra.mxu0 %v673
    %937 = vmatprep.subr.bf16.mxu0 %v667
    %938 = vmatpush1.bf16.msra.mxu0 %v666
    %939 = vmatprep.subr.bf16.mxu0 %v660
    %940 = vmatpush1.bf16.msra.mxu0 %v659
    %941 = vmatprep.subr.bf16.mxu0 %v653
    %942 = vmatpush1.bf16.msra.mxu0 %v652
    %943 = vmatprep.subr.bf16.mxu0 %v646
    %944 = vmatpush1.bf16.msra.mxu0 %v645
    %945 = vmatprep.subr.bf16.mxu0 %v639
    %946 = vmatpush1.bf16.msra.mxu0 %v638
    %947 = vmatprep.subr.bf16.mxu0 %v632
    %948 = vmatpush1.bf16.msra.mxu0 %v631
    %949 = vmatprep.subr.bf16.mxu0 %v737
    %950 = vmatpush2.bf16.msra.mxu0 %v736
    %951 = vmatprep.subr.bf16.mxu0 %v730
    %952 = vmatpush2.bf16.msra.mxu0 %v729
    %953 = vmatprep.subr.bf16.mxu0 %v723
    %954 = vmatpush2.bf16.msra.mxu0 %v722
    %955 = vmatprep.subr.bf16.mxu0 %v716
    %956 = vmatpush2.bf16.msra.mxu0 %v715
    %957 = vmatprep.subr.bf16.mxu0 %v709
    %958 = vmatpush2.bf16.msra.mxu0 %v708
    %959 = vmatprep.subr.bf16.mxu0 %v702
    %960 = vmatpush2.bf16.msra.mxu0 %v701
    %961 = vmatprep.subr.bf16.mxu0 %v695
    %962 = vmatpush2.bf16.msra.mxu0 %v694
    %963 = vmatprep.subr.bf16.mxu0 %v688
    %964 = vmatpush2.bf16.msra.mxu0 %v687
    %965 = vmatprep.mubr.bf16.mxu0 %v109
    %966 = vmatmul.mubr.bf16.gmra.mxu0 %v108
    %v967 = vpop.f32.mrf.mxu0
    %v968 = vadd.f32 %v259, %v967
    %v969 = vpop.f32.mrf.mxu0
    %v970 = vadd.f32 %v263, %v969
    %v971 = vpop.f32.mrf.mxu0
    %v972 = vpop.f32.mrf.mxu0
    %973 = vdwg.mxu0
    %974 = vmatprep.subr.bf16.mxu0 0
    %975 = vmatpush1.bf16.msra.mxu0 %v682
    %976 = vmatprep.subr.bf16.mxu0 0
    %977 = vmatpush1.bf16.msra.mxu0 %v675
    %978 = vmatprep.subr.bf16.mxu0 0
    %979 = vmatpush1.bf16.msra.mxu0 %v668
    %980 = vmatprep.subr.bf16.mxu0 0
    %981 = vmatpush1.bf16.msra.mxu0 %v661
    %982 = vmatprep.subr.bf16.mxu0 0
    %983 = vmatpush1.bf16.msra.mxu0 %v654
    %984 = vmatprep.subr.bf16.mxu0 0
    %985 = vmatpush1.bf16.msra.mxu0 %v647
    %986 = vmatprep.subr.bf16.mxu0 0
    %987 = vmatpush1.bf16.msra.mxu0 %v640
    %988 = vmatprep.subr.bf16.mxu0 0
    %989 = vmatpush1.bf16.msra.mxu0 %v633
    %990 = vmatprep.subr.bf16.mxu0 0
    %991 = vmatpush2.bf16.msra.mxu0 %v738
    %992 = vmatprep.subr.bf16.mxu0 0
    %993 = vmatpush2.bf16.msra.mxu0 %v731
    %994 = vmatprep.subr.bf16.mxu0 0
    %995 = vmatpush2.bf16.msra.mxu0 %v724
    %996 = vmatprep.subr.bf16.mxu0 0
    %997 = vmatpush2.bf16.msra.mxu0 %v717
    %998 = vmatprep.subr.bf16.mxu0 0
    %999 = vmatpush2.bf16.msra.mxu0 %v710
    %1000 = vmatprep.subr.bf16.mxu0 0
    %1001 = vmatpush2.bf16.msra.mxu0 %v703
    %1002 = vmatprep.subr.bf16.mxu0 0
    %1003 = vmatpush2.bf16.msra.mxu0 %v696
    %1004 = vmatprep.subr.bf16.mxu0 0
    %1005 = vmatpush2.bf16.msra.mxu0 %v689
    %1006 = vmatprep.mubr.bf16.mxu0 %v109
    %1007 = vmatmul.mubr.bf16.gmra.mxu0 %v108
    %v1008 = vpop.f32.mrf.mxu0
    %v1009 = vadd.f32 %v267, %v1008
    %v1010 = vpop.f32.mrf.mxu0
    %v1011 = vpop.f32.mrf.mxu0
    %v1012 = vpop.f32.mrf.mxu0
    %1013 = vdwg.mxu0
    %v1014 = vmul.f32 %v886, 0.5
    %v1015 = vmul.f32 %v888, 0.5
    %v1016 = vmul.f32 %v927, 0.5
    %v1017 = vmul.f32 %v929, 0.5
    %v1018 = vmul.f32 %v968, 0.5
    %v1019 = vmul.f32 %v970, 0.5
    %v1020 = vmul.f32 %v1009, 0.5
    %v1021 = vtanh.pop %v1014
    %v1022 = vtanh.pop %v1015
    %v1023 = vtanh.pop %v1016
    %v1024 = vtanh.pop %v1017
    %v1025 = vtanh.pop %v1018
    %v1026 = vtanh.pop %v1019
    %v1027 = vtanh.pop %v1020
    %v1028 = vmul.f32 %v1021, 0.5
    %v1029 = vmul.f32 %v1022, 0.5
    %v1030 = vmul.f32 %v1023, 0.5
    %v1031 = vmul.f32 %v1024, 0.5
    %v1032 = vmul.f32 %v1025, 0.5
    %v1033 = vmul.f32 %v1026, 0.5
    %v1034 = vmul.f32 %v1027, 0.5
    %v1035 = vadd.f32 %v1028, 0.5
    %v1036 = vadd.f32 %v1029, 0.5
    %v1037 = vadd.f32 %v1030, 0.5
    %v1038 = vadd.f32 %v1031, 0.5
    %v1039 = vadd.f32 %v1032, 0.5
    %v1040 = vadd.f32 %v1033, 0.5
    %v1041 = vadd.f32 %v1034, 0.5
    %1042 = vst [vmem:[#allocation2] sm:$0xff] %v1035
    %1043 = vst [vmem:[#allocation2 + $0x8] sm:$0xff] %v1036
    %1044 = vst [vmem:[#allocation2 + $0x10] sm:$0xff] %v1037
    %1045 = vst [vmem:[#allocation2 + $0x18] sm:$0xff] %v1038
    %1046 = vst [vmem:[#allocation2 + $0x20] sm:$0xff] %v1039
    %1047 = vst [vmem:[#allocation2 + $0x28] sm:$0xff] %v1040
    %vm1048 = vcmask 130048
    %1049 = vst.msk [vmem:[#allocation2 + $0x30] sm:$0xff] %vm1048, %v1041
    // Predicated region
    $region22: #{tpu_custom_call.1} parent=1 // pred_check
      _
    $region23: #{tpu_custom_call.1} parent=1 // pred_check_branch
      %1051 = sbr.rel (0) target = $region25
    $region24: #{tpu_custom_call.1} parent=1 // pred_region
      %s1053 = ssub.s32 896, 896
      %1054 = vsyncadd [#allocation3], %s1053
      %s1056 = sshll.u32 [#allocation2], 4
      %s1057 = int_to_ptr.vmem [resolvable:$true] %s1056
      %1059 = dma.vmem_to_hbm [thread:$0]  %s1057, 896, %s5, [#allocation3]
    $region25: #{tpu_custom_call.1} parent=1 // pred_fallthru
      _
    // Predicated region
    $region26: #{tpu_custom_call.1} parent=1 // pred_check
      _
    $region27: #{tpu_custom_call.1} parent=1 // pred_check_branch
      %1061 = sbr.rel (0) target = $region29
    $region28: #{tpu_custom_call.1} parent=1 // pred_region
      %1062 = dma.done [#allocation3], 896
    $region29: #{tpu_custom_call.1} parent=1 // pred_fallthru
      _
    %1063 = vsyncpa [#allocation3], 1

</llo_original>
